<compile_context>
chip_gen: v5e
topology: v5e:2x2
jax: 0.10.0
libtpu: 0.0.40
codegen_flags: <defaults>
</compile_context>

<pallas_src>
import jax
import jax.numpy as jnp
import numpy as np
from jax.experimental import pallas as pl
from jax.experimental.pallas import tpu as pltpu


# ---------------------------------------------------------------------------
# Pallas kernel: per-(batch, HW-tile) reduction matmul + ReLU
# ---------------------------------------------------------------------------
def _reduction_matmul_kernel(cw_ref, feat_ref, out_ref):
    # cw_ref   : (1, F, C_in)    attention-folded reduction weight (per batch)
    # feat_ref : (1, C_in, t_hw) one lane tile of the flattened feature map
    # out_ref  : (1, F, t_hw)
    acc = jnp.dot(cw_ref[0], feat_ref[0], preferred_element_type=jnp.float32)
    out_ref[0] = jnp.maximum(acc, 0.0).astype(out_ref.dtype)


# ---------------------------------------------------------------------------
# Helpers
# ---------------------------------------------------------------------------
def _round_up(x, m):
    return (x + m - 1) // m * m


def _cdiv(a, b):
    return -(-a // b)


def _vmem_capacity_bytes():
    """Per-core VMEM capacity; conservative fallback if the query fails."""
    try:
        cap = getattr(pltpu.get_tpu_info(), "vmem_capacity_bytes", None)
        if cap:
            return int(cap)
    except Exception:
        pass
    return 64 * 1024 * 1024  # v7x per-TC VMEM (smallest current generation)


def _choose_tile_hw(hw, c_in, f_out, itemsize, batch, *, min_programs=4):
    """Lane tile (multiple of 128) sized from the real double-buffered
    footprint (feat + out + cw) against a generation-aware VMEM budget, then
    clamped so the grid has enough programs for megacore occupancy."""
    cap = _vmem_capacity_bytes()
    # Keep the pipelined working set within ~35% of VMEM (<= 24 MiB); measured
    # streaming data shows no bandwidth gain from bigger tiles.
    budget = min(int(0.35 * cap), 24 * 1024 * 1024)
    fixed = 2 * f_out * c_in * itemsize            # cw (resident, double-buffer worst case)
    per_lane = 2 * (c_in + f_out) * itemsize       # feat + out tiles, double-buffered
    max_t = max(128, ((budget - fixed) // max(1, per_lane)) // 128 * 128)
    t = min(max_t, 8192, _round_up(hw, 128))
    t = max(128, (t // 128) * 128)
    # Megacore / pipeline occupancy: ~0.35 us/step extra is negligible vs DMA.
    while t > 128 and batch * _cdiv(hw, t) < min_programs:
        t = max(128, ((t // 2) // 128) * 128)
    return t


# ---------------------------------------------------------------------------
# Forward wrapper
# ---------------------------------------------------------------------------
def task_decomposition_forward(feat, params, *, feat_channels, stacked_convs,
                               avg_feat=None, compute_dtype=jnp.bfloat16):
    """feat: (B, C_in, H, W) with C_in = feat_channels * stacked_convs.

    compute_dtype: dtype of the matmul operands fed to the MXU (accumulation
    is always f32).  Default bf16 halves HBM traffic; pass jnp.float32 for
    bit-for-bit-tight results.
    """
    w1, b1, w2, b2, wr = params
    b, c_in, h, w = feat.shape
    assert c_in == feat_channels * stacked_convs
    hw = h * w
    out_dtype = feat.dtype
    if compute_dtype is None:
        compute_dtype = feat.dtype

    # --- layer attention (tiny; hoisted out of the tiled Pallas path) -------
    if avg_feat is None:
        # NOTE: supplying avg_feat (as the TOOD head does) skips this extra
        # full read of the (B, C_in, HW) slab.
        avg = jnp.mean(feat.astype(jnp.float32), axis=(2, 3))          # (B, C_in)
    else:
        avg = avg_feat.reshape(b, c_in).astype(jnp.float32)
    w1_2d = w1.reshape(w1.shape[0], -1).astype(jnp.float32)
    w2_2d = w2.reshape(w2.shape[0], -1).astype(jnp.float32)
    h1 = jnp.maximum(avg @ w1_2d.T + b1.reshape(-1).astype(jnp.float32), 0.0)
    att = jax.nn.sigmoid(h1 @ w2_2d.T + b2.reshape(-1).astype(jnp.float32))   # (B, S)

    # Fold attention into the reduction weight:
    #   cw[b, f, s*F + g] = att[b, s] * Wr[f, s*F + g]
    cw = (att[:, None, :, None] *
          wr.reshape(1, feat_channels, stacked_convs, feat_channels)
            .astype(jnp.float32))
    cw = cw.reshape(b, feat_channels, c_in).astype(compute_dtype)      # (B, F, C_in)

    feat_flat = feat.reshape(b, c_in, hw).astype(compute_dtype)        # (B, C_in, HW)

    # --- tiled Pallas matmul + ReLU (no pad, ragged last tile masked) -------
    itemsize = jnp.dtype(compute_dtype).itemsize
    out_itemsize = jnp.dtype(out_dtype).itemsize
    t_hw = _choose_tile_hw(hw, c_in, feat_channels, itemsize, b)
    grid = (b, _cdiv(hw, t_hw))            # hw innermost -> cw not re-fetched

    # Generation-aware VMEM limit derived from the actual tile footprints.
    cap = _vmem_capacity_bytes()
    vmem_needed = (itemsize * (2 * c_in * t_hw + 2 * feat_channels * c_in)
                   + out_itemsize * 2 * feat_channels * t_hw)
    vmem_limit = int(min(max(int(1.25 * vmem_needed), 16 * 1024 * 1024),
                         int(0.6 * cap)))

    cost = pl.CostEstimate(
        flops=2 * b * feat_channels * c_in * hw,
        transcendentals=0,
        bytes_accessed=(itemsize * b * (c_in * hw + feat_channels * c_in)
                        + out_itemsize * b * feat_channels * hw))

    out_flat = pl.pallas_call(
        _reduction_matmul_kernel,
        out_shape=jax.ShapeDtypeStruct((b, feat_channels, hw), out_dtype),
        grid=grid,
        in_specs=[
            pl.BlockSpec((1, feat_channels, c_in), lambda bi, hi: (bi, 0, 0)),
            pl.BlockSpec((1, c_in, t_hw), lambda bi, hi: (bi, 0, hi)),
        ],
        out_specs=pl.BlockSpec((1, feat_channels, t_hw),
                               lambda bi, hi: (bi, 0, hi)),
        compiler_params=pltpu.CompilerParams(
            dimension_semantics=("parallel", "parallel"),
            vmem_limit_bytes=vmem_limit),
        cost_estimate=cost,
    )(cw, feat_flat)

    return out_flat.reshape(b, feat_channels, h, w)


# ---------------------------------------------------------------------------
# Pure-JAX reference mirroring the PyTorch forward
# ---------------------------------------------------------------------------
def _reference_forward(feat, params, *, feat_channels, stacked_convs):
    w1, b1, w2, b2, wr = params
    b, c_in, h, w = feat.shape
    avg = jnp.mean(feat, axis=(2, 3))                                  # (B, C_in)
    h1 = jnp.maximum(avg @ w1.T + b1.reshape(-1), 0.0)                 # (B, C_mid)
    att = jax.nn.sigmoid(h1 @ w2.T + b2.reshape(-1))                   # (B, S)
    cw = (att[:, None, :, None] *
          wr.reshape(1, feat_channels, stacked_convs, feat_channels))
    cw = cw.reshape(b, feat_channels, c_in)                            # (B, F, C_in)
    x = feat.reshape(b, c_in, h * w)
    out = jnp.einsum('bfc,bcp->bfp', cw, x).reshape(b, feat_channels, h, w)
    return jnp.maximum(out, 0.0)


if __name__ == "__main__":
    # Small config: feat_channels=8, stacked_convs=4, la_down_rate=8
    feat_channels = 8
    stacked_convs = 4
    la_down_rate = 8
    in_channels = feat_channels * stacked_convs          # 32
    c_mid = in_channels // la_down_rate                  # 4

    key = jax.random.PRNGKey(0)
    k_feat, k_feat2, k_w1, k_w2, k_wr = jax.random.split(key, 5)

    # Deterministic parameter init (mirrors normal_init stds, zero biases).
    w1 = 0.001 * jax.random.normal(k_w1, (c_mid, in_channels), jnp.float32)
    b1 = jnp.zeros((c_mid,), jnp.float32)
    w2 = 0.001 * jax.random.normal(k_w2, (stacked_convs, c_mid), jnp.float32)
    b2 = jnp.zeros((stacked_convs,), jnp.float32)
    wr = 0.01 * jax.random.normal(k_wr, (feat_channels, in_channels), jnp.float32)
    params = (w1, b1, w2, b2, wr)

    # --- Test 1: aligned spatial size, exact f32 compute path ---------------
    B, H, W = 2, 16, 16
    feat = jax.random.normal(k_feat, (B, in_channels, H, W), dtype=jnp.float32)
    out = jax.block_until_ready(task_decomposition_forward(
        feat, params, feat_channels=feat_channels, stacked_convs=stacked_convs,
        compute_dtype=jnp.float32))
    ref = _reference_forward(
        feat, params, feat_channels=feat_channels, stacked_convs=stacked_convs)
    np.testing.assert_allclose(np.asarray(out), np.asarray(ref),
                               rtol=1e-5, atol=1e-5)

    # --- Test 2: ragged spatial size (HW not a multiple of 128) exercising
    #     the masked boundary tile, default bf16 operand path ----------------
    B2, H2, W2 = 2, 12, 15                                # HW = 180
    feat2 = jax.random.normal(k_feat2, (B2, in_channels, H2, W2),
                              dtype=jnp.float32)
    out2 = jax.block_until_ready(task_decomposition_forward(
        feat2, params, feat_channels=feat_channels, stacked_convs=stacked_convs))
    ref2 = _reference_forward(
        feat2, params, feat_channels=feat_channels, stacked_convs=stacked_convs)
    np.testing.assert_allclose(np.asarray(out2), np.asarray(ref2),
                               rtol=2e-2, atol=2e-3)      # bf16 operands

    print("KERNEL_OK")
</pallas_src>

<mosaic_0001>
module attributes {stable_mosaic.version = 11 : i64} {
  func.func @_reduction_matmul_kernel(%arg0: i32, %arg1: i32, %arg2: memref<1x8x32xf32, #tpu.memory_space<vmem>>, %arg3: memref<1x32x128xf32, #tpu.memory_space<vmem>>, %arg4: memref<1x8x128xf32, #tpu.memory_space<vmem>>) attributes {dimension_semantics = [#tpu.dimension_semantics<parallel>, #tpu.dimension_semantics<parallel>], iteration_bounds = array<i64: 2, 2>, scalar_prefetch = 0 : i64, scratch_operands = 0 : i64, tpu.core_type = #tpu.core_type<tc>, window_params = [{transform_indices = @transform_0, window_bounds = array<i64: 1, 8, 32>}, {transform_indices = @transform_1, window_bounds = array<i64: 1, 32, 128>}, {transform_indices = @transform_2, window_bounds = array<i64: 1, 8, 128>}]} {
    %c0 = arith.constant 0 : index
    %c0_0 = arith.constant 0 : index
    %c0_1 = arith.constant 0 : index
    %0 = vector.load %arg2[%c0, %c0_0, %c0_1] : memref<1x8x32xf32, #tpu.memory_space<vmem>>, vector<1x8x32xf32>
    %1 = vector.shape_cast %0 : vector<1x8x32xf32> to vector<8x32xf32>
    %c0_2 = arith.constant 0 : index
    %c0_3 = arith.constant 0 : index
    %c0_4 = arith.constant 0 : index
    %2 = vector.load %arg3[%c0_2, %c0_3, %c0_4] : memref<1x32x128xf32, #tpu.memory_space<vmem>>, vector<1x32x128xf32>
    %3 = vector.shape_cast %2 : vector<1x32x128xf32> to vector<32x128xf32>
    %cst = arith.constant dense<0.000000e+00> : vector<8x128xf32>
    %4 = tpu.matmul %1, %3, %cst {dimension_numbers = #tpu.dot_dimension_numbers<[1], [0], [0], [1], [0, 0, 1, 1], [], []>} : vector<8x32xf32>, vector<32x128xf32>, vector<8x128xf32> -> vector<8x128xf32>
    %cst_5 = arith.constant 0.000000e+00 : f32
    %5 = vector.broadcast %cst_5 : f32 to vector<8x128xf32>
    %6 = arith.maximumf %4, %5 : vector<8x128xf32>
    %c0_6 = arith.constant 0 : index
    %c0_7 = arith.constant 0 : index
    %c0_8 = arith.constant 0 : index
    %7 = vector.load %arg4[%c0_6, %c0_7, %c0_8] : memref<1x8x128xf32, #tpu.memory_space<vmem>>, vector<1x8x128xf32>
    %8 = vector.shape_cast %7 : vector<1x8x128xf32> to vector<8x128xf32>
    %9 = vector.shape_cast %6 : vector<8x128xf32> to vector<1x8x128xf32>
    tpu.vector_store %arg4[%c0_6, %c0_7, %c0_8], %9 {strides = array<i32>} : memref<1x8x128xf32, #tpu.memory_space<vmem>>, vector<1x8x128xf32>,
    return
  }
  func.func @transform_0(%arg0: i32, %arg1: i32) -> (i32, i32, i32) {
    %c0_i32 = arith.constant 0 : i32
    %c0_i32_0 = arith.constant 0 : i32
    %c0_i32_1 = arith.constant 0 : i32
    return %arg0, %c0_i32, %c0_i32_0 : i32, i32, i32
  }
  func.func @transform_1(%arg0: i32, %arg1: i32) -> (i32, i32, i32) {
    %c0_i32 = arith.constant 0 : i32
    %c0_i32_0 = arith.constant 0 : i32
    return %arg0, %c0_i32, %arg1 : i32, i32, i32
  }
  func.func @transform_2(%arg0: i32, %arg1: i32) -> (i32, i32, i32) {
    %c0_i32 = arith.constant 0 : i32
    %c0_i32_0 = arith.constant 0 : i32
    return %arg0, %c0_i32, %arg1 : i32, i32, i32
  }
}

</mosaic_0001>

<llo_original>
// kernel: tpu_custom_call.1
$region0: #{tpu_custom_call.1}
  #allocation0 [shape = 'u32[]', space=smem, size = 0x4, offset = 0x4, fixed_abs, tag = 'smem constant byte address 0x4 - core index']
  #allocation1 [shape = 'u32[72,128]{1,0:T(1,128)}', space=vmem, size = 0x9000, scoped, tag = 'internal scratch']
  %s0 = inlined_call_operand.hbm [shape: f32[2,8,32], index: 0, kind: input, shape index: {}]
  %s1 = inlined_call_operand.hbm [shape: f32[2,32,256], index: 1, kind: input, shape index: {}]
  %s2 = inlined_call_operand.hbm [shape: f32[2,8,256], index: 2, kind: output, shape index: {}]
  %s3 = sld [smem:[#allocation0]]
  $region49: #{tpu_custom_call.1} parent=0
    _
  %s5 = ssub.s32 1, %s3
  %s6 = scalar_select 0, %s5, %s3
  $region1: #{tpu_custom_call.1} parent=0
    #allocation2 [shape = 'u8[8192]{0}', space=vmem, size = 0x2000, scoped, tag = 'input window, operand 0']
    #allocation3 [shape = 's32[2]{0}', space=sflag, size = 0x8, scoped, tag = 'scoped memory for tpu_custom_call.1']
    #allocation4 [shape = 's32[2]{0}', space=sflag, size = 0x8, scoped, tag = 'scoped memory for tpu_custom_call.1']
    #allocation5 [shape = 'u8[32768]{0}', space=vmem, size = 0x8000, scoped, tag = 'input window, operand 1']
    #allocation6 [shape = 's32[2]{0}', space=sflag, size = 0x8, scoped, tag = 'scoped memory for tpu_custom_call.1']
    #allocation7 [shape = 'u8[8192]{0}', space=vmem, size = 0x2000, scoped, tag = 'output window, operand 0']
    %7 = vsyncpa [#allocation3], 0
    %s8 = scalar_lea.sflag [#allocation3], 1
    %9 = vsyncpa %s8, 0
    %10 = vsyncpa [#allocation6], 0
    %s11 = scalar_lea.sflag [#allocation6], 1
    %12 = vsyncpa %s11, 0
    %13 = vsyncpa [#allocation4], 0
    %s14 = scalar_lea.sflag [#allocation4], 1
    %15 = vsyncpa %s14, 0
    loop: start=0, step=1, limit=6
    $region2: #{tpu_custom_call.1} parent=1 // loop_pre_header
      _
    $region3: #{tpu_custom_call.1} parent=1 // loop_header
      %s17 = sphi 0, %s21
      %p18 = scmp.ge.s32.totalorder %s17, 6
      %s24 = sphi 0, %s36
      %s25 = sphi 0, %s32
      %s26 = sphi 0, %s24
      %s27 = sphi 0, %s25
      %s28 = sphi 0, %s26
      %s29 = sphi 0, %s27
      %s39 = sphi 0, %s41
      %s42 = sphi 0, %s39
      %s43 = sphi 0, %s42
      %s59 = sphi 0, %s43
      %s67 = sphi 0, %s69
      %s70 = sphi 0, %s67
      %s71 = sphi 0, %s70
      %s87 = sphi 0, %s71
      %s95 = sphi 0, %s97
      %s98 = sphi 0, %s95
      %s99 = sphi 0, %s98
      %s115 = sphi 0, %s99
    $region4: #{tpu_custom_call.1} parent=1 // loop_header_branch
      %20 = sbr.rel (%p18) target = $region8
    $region5: #{tpu_custom_call.1} parent=1 // loop_body
      %s22 = ssub.s32 %s17, 1
      %s23 = ssub.s32 %s17, 2
      %s30 = sadd.s32 1, %s25
      %p31 = scmp.ge.s32.totalorder %s30, 2
      %s32 = scalar_select %p31, 0, %s30
      %s33 = sadd.s32 1, %s24
      %s34 = scalar_select %p31, %s33, %s24
      %p35 = scmp.ge.s32.totalorder %s34, 2
      %s36 = scalar_select %p35, 0, %s34
      %s37 = ssub.s32 %s24, %s36
      %p38 = scmp.eq.s32.totalorder %s37, 0
      %s40 = sadd.s32 %s39, 1
      %s41 = scalar_select %p38, %s39, %s40
      %p44 = pneg %p38
      %p45 = scmp.eq.s32.totalorder %s17, 3
      %p46 = por %p44, %p45
      %p47 = scmp.ne.s32.totalorder %s39, %s42
      %p48 = scmp.eq.s32.totalorder %s17, 0
      %p49 = por %p47, %p48
      %p50 = scmp.ne.s32.totalorder %s39, %s42
      %p51 = scmp.eq.s32.totalorder %s22, 3
      %p52 = por %p50, %p51
      %p53 = scmp.ne.s32.totalorder %s42, %s43
      %p54 = scmp.eq.s32.totalorder %s22, 0
      %p55 = por %p53, %p54
      %p56 = scmp.ne.s32.totalorder %s42, %s43
      %p57 = scmp.eq.s32.totalorder %s23, 3
      %p58 = por %p56, %p57
      %p60 = scmp.ne.s32.totalorder %s43, %s59
      %p61 = scmp.eq.s32.totalorder %s23, 0
      %p62 = por %p60, %p61
      %s63 = ssub.s32 %s24, %s36
      %s64 = ssub.s32 %s25, %s32
      %s65 = sor.u32 %s63, %s64
      %p66 = scmp.eq.s32.totalorder %s65, 0
      %s68 = sadd.s32 %s67, 1
      %s69 = scalar_select %p66, %s67, %s68
      %p72 = pneg %p66
      %p73 = scmp.eq.s32.totalorder %s17, 3
      %p74 = por %p72, %p73
      %p75 = scmp.ne.s32.totalorder %s67, %s70
      %p76 = scmp.eq.s32.totalorder %s17, 0
      %p77 = por %p75, %p76
      %p78 = scmp.ne.s32.totalorder %s67, %s70
      %p79 = scmp.eq.s32.totalorder %s22, 3
      %p80 = por %p78, %p79
      %p81 = scmp.ne.s32.totalorder %s70, %s71
      %p82 = scmp.eq.s32.totalorder %s22, 0
      %p83 = por %p81, %p82
      %p84 = scmp.ne.s32.totalorder %s70, %s71
      %p85 = scmp.eq.s32.totalorder %s23, 3
      %p86 = por %p84, %p85
      %p88 = scmp.ne.s32.totalorder %s71, %s87
      %p89 = scmp.eq.s32.totalorder %s23, 0
      %p90 = por %p88, %p89
      %s91 = ssub.s32 %s24, %s36
      %s92 = ssub.s32 %s25, %s32
      %s93 = sor.u32 %s91, %s92
      %p94 = scmp.eq.s32.totalorder %s93, 0
      %s96 = sadd.s32 %s95, 1
      %s97 = scalar_select %p94, %s95, %s96
      %p100 = pneg %p94
      %p101 = scmp.eq.s32.totalorder %s17, 3
      %p102 = por %p100, %p101
      %p103 = scmp.ne.s32.totalorder %s95, %s98
      %p104 = scmp.eq.s32.totalorder %s17, 0
      %p105 = por %p103, %p104
      %p106 = scmp.ne.s32.totalorder %s95, %s98
      %p107 = scmp.eq.s32.totalorder %s22, 3
      %p108 = por %p106, %p107
      %p109 = scmp.ne.s32.totalorder %s98, %s99
      %p110 = scmp.eq.s32.totalorder %s22, 0
      %p111 = por %p109, %p110
      %p112 = scmp.ne.s32.totalorder %s98, %s99
      %p113 = scmp.eq.s32.totalorder %s23, 3
      %p114 = por %p112, %p113
      %p116 = scmp.ne.s32.totalorder %s99, %s115
      %p117 = scmp.eq.s32.totalorder %s23, 0
      %p118 = por %p116, %p117
      %p119 = scmp.le.s32.totalorder 1, %s17
      %p120 = scmp.lt.s32.totalorder %s17, 5
      %p121 = pnand %p119, %p120
      %p122 = pneg %p121
      // Predicated region
      $region9: #{tpu_custom_call.1} parent=5 // pred_check
        _
      $region10: #{tpu_custom_call.1} parent=5 // pred_check_branch
        %124 = sbr.rel (%p121) target = $region12
      $region11: #{tpu_custom_call.1} parent=5 // pred_region
        %s125 = ssub.s32 %s17, 1
      $region12: #{tpu_custom_call.1} parent=5 // pred_fallthru
        _
      %p126 = scmp.lt.s32.totalorder %s17, 4
      // Predicated region
      $region13: #{tpu_custom_call.1} parent=5 // pred_check
        %p127 = pneg %p126
      $region14: #{tpu_custom_call.1} parent=5 // pred_check_branch
        %129 = sbr.rel (%p127) target = $region16
      $region15: #{tpu_custom_call.1} parent=5 // pred_region
        // Predicated region
        $region17: #{tpu_custom_call.1} parent=15 // pred_check
          %p130 = pneg %p49
        $region18: #{tpu_custom_call.1} parent=15 // pred_check_branch
          %132 = sbr.rel (%p130) target = $region20
        $region19: #{tpu_custom_call.1} parent=15 // pred_region
          %s133 = sand.u32 %s39, 1
          %s134 = scalar_lea.sflag [#allocation3], %s133
          %s135 = sand.u32 %s39, 1
          %s136 = smul.addr %s135, 8
          %s137 = scalar_lea.vmem [#allocation2], %s136
          %139 = vsyncadd %s134, 0
          %s140 = smul.addr %s24, 8
          %s141 = scalar_lea.hbm %s0, %s140
          %s143 = sshll.u32 %s141, 4
          %s144 = int_to_ptr.hbm [resolvable:$true] %s143
          %s145 = sshll.u32 %s137, 4
          %s146 = int_to_ptr.vmem [resolvable:$true] %s145
          %148 = dma.hbm_to_vmem [thread:$0]  %s144, 128, %s146, %s134
        $region20: #{tpu_custom_call.1} parent=15 // pred_fallthru
          _
        // Predicated region
        $region21: #{tpu_custom_call.1} parent=15 // pred_check
          %p149 = pneg %p77
        $region22: #{tpu_custom_call.1} parent=15 // pred_check_branch
          %151 = sbr.rel (%p149) target = $region24
        $region23: #{tpu_custom_call.1} parent=15 // pred_region
          %s152 = sand.u32 %s67, 1
          %s153 = scalar_lea.sflag [#allocation6], %s152
          %s154 = sand.u32 %s67, 1
          %s155 = smul.addr %s154, 32
          %s156 = scalar_lea.vmem [#allocation5], %s155
          %158 = vsyncadd %s153, 0
          %s159 = smul.addr %s24, 8
          %s160 = sadd.s32 %s25, %s159
          %s161 = smul.addr %s160, 8
          %s162 = scalar_lea.hbm %s1, %s161
          %s163 = sshll.u32 %s162, 4
          %s164 = int_to_ptr.hbm [resolvable:$true] %s163
          %s165 = sshll.u32 %s156, 4
          %s166 = int_to_ptr.vmem [resolvable:$true] %s165
          %171 = dma.hbm_to_vmem [thread:$0]  %s164, 512, %s166, %s153, 256, 128, 8
        $region24: #{tpu_custom_call.1} parent=15 // pred_fallthru
          _
      $region16: #{tpu_custom_call.1} parent=5 // pred_fallthru
        _
      %p172 = scmp.le.s32.totalorder 1, %s17
      %p173 = scmp.lt.s32.totalorder %s17, 5
      %p174 = pnand %p172, %p173
      %p175 = pneg %p174
      // Predicated region
      $region25: #{tpu_custom_call.1} parent=5 // pred_check
        _
      $region26: #{tpu_custom_call.1} parent=5 // pred_check_branch
        %177 = sbr.rel (%p174) target = $region28
      $region27: #{tpu_custom_call.1} parent=5 // pred_region
        %s178 = ssub.s32 %s17, 1
        %s179 = sand.u32 %s42, 1
        %s180 = scalar_lea.sflag [#allocation3], %s179
        %s181 = sand.u32 %s42, 1
        %s182 = smul.addr %s181, 8
        %s183 = scalar_lea.vmem [#allocation2], %s182
        // Predicated region
        $region29: #{tpu_custom_call.1} parent=27 // pred_check
          %p184 = pneg %p55
        $region30: #{tpu_custom_call.1} parent=27 // pred_check_branch
          %186 = sbr.rel (%p184) target = $region32
        $region31: #{tpu_custom_call.1} parent=27 // pred_region
          %188 = dma.done %s180, 128
        $region32: #{tpu_custom_call.1} parent=27 // pred_fallthru
          _
        %s189 = sand.u32 %s70, 1
        %s190 = scalar_lea.sflag [#allocation6], %s189
        %s191 = sand.u32 %s70, 1
        %s192 = smul.addr %s191, 32
        %s193 = scalar_lea.vmem [#allocation5], %s192
        // Predicated region
        $region33: #{tpu_custom_call.1} parent=27 // pred_check
          %p194 = pneg %p83
        $region34: #{tpu_custom_call.1} parent=27 // pred_check_branch
          %196 = sbr.rel (%p194) target = $region36
        $region35: #{tpu_custom_call.1} parent=27 // pred_region
          %198 = dma.done %s190, 512
        $region36: #{tpu_custom_call.1} parent=27 // pred_fallthru
          _
        %s199 = sand.u32 %s42, 1
        %s200 = scalar_lea.sflag [#allocation3], %s199
        %s201 = sand.u32 %s42, 1
        %s202 = smul.addr %s201, 8
        %s203 = scalar_lea.vmem [#allocation2], %s202
        %p204 = pneg %p55
        %p205 = pneg %p52
        %s206 = sand.u32 %s70, 1
        %s207 = scalar_lea.sflag [#allocation6], %s206
        %s208 = sand.u32 %s70, 1
        %s209 = smul.addr %s208, 32
        %s210 = scalar_lea.vmem [#allocation5], %s209
        %p211 = pneg %p83
        %p212 = pneg %p80
        %p213 = pneg %p111
        %p214 = pneg %p108
        %s215 = sand.u32 %s98, 1
        %s216 = scalar_lea.sflag [#allocation4], %s215
        %s217 = sand.u32 %s98, 1
        %s218 = smul.addr %s217, 8
        %s219 = scalar_lea.vmem [#allocation7], %s218
        %v220 = vld [vmem:[%s183] sm:$0xff]
        %v221 = vld [vmem:[%s193] sm:$0xff]
        %v222 = vld [vmem:[%s193 + $0x8] sm:$0xff]
        %v223 = vld [vmem:[%s193 + $0x10] sm:$0xff]
        %v224 = vld [vmem:[%s193 + $0x18] sm:$0xff]
        %vm225 = vcmask 261120
        %v227 = vsel %vm225, %v220, 0
        %229 = vmatpush.msra.mxu0 0.0
        %230 = vmatpush.msra.mxu0 0.0
        %231 = vmatpush.msra.mxu0 0.0
        %232 = vmatpush.msra.mxu0 0.0
        %233 = vmatpush.msra.mxu0 0.0
        %234 = vmatpush.msra.mxu0 0.0
        %235 = vmatpush.msra.mxu0 0.0
        %236 = vmatpush.msra.mxu0 0.0
        %237 = vmatpush.msra.mxu0 0.0
        %238 = vmatpush.msra.mxu0 0.0
        %239 = vmatpush.msra.mxu0 0.0
        %240 = vmatpush.msra.mxu0 0.0
        %241 = vmatpush.msra.mxu0 %v224
        %242 = vmatpush.msra.mxu0 %v223
        %243 = vmatpush.msra.mxu0 %v222
        %244 = vmatpush.msra.mxu0 %v221
        %245 = vmatmul.f32.gmra.mxu0 %v227
        %v246 = vpop.f32.mrf.mxu0
        %v247 = vadd.f32 0.0, %v246
        %248 = vdwg.mxu0
        %v249 = vmax.f32 %v247, 0.0
        %250 = vst [vmem:[%s219] sm:$0xff] %v249
        %s251 = sand.u32 %s98, 1
        %s252 = scalar_lea.sflag [#allocation4], %s251
        %s253 = sand.u32 %s98, 1
        %s254 = smul.addr %s253, 8
        %s255 = scalar_lea.vmem [#allocation7], %s254
        // Predicated region
        $region37: #{tpu_custom_call.1} parent=27 // pred_check
          %p256 = pneg %p108
        $region38: #{tpu_custom_call.1} parent=27 // pred_check_branch
          %258 = sbr.rel (%p256) target = $region40
        $region39: #{tpu_custom_call.1} parent=27 // pred_region
          %260 = vsyncadd %s252, 0
          %s261 = smul.addr %s26, 2
          %s262 = sadd.s32 %s27, %s261
          %s263 = smul.addr %s262, 8
          %s264 = scalar_lea.hbm %s2, %s263
          %s266 = sshll.u32 %s255, 4
          %s267 = int_to_ptr.vmem [resolvable:$true] %s266
          %s268 = sshll.u32 %s264, 4
          %s269 = int_to_ptr.hbm [resolvable:$true] %s268
          %271 = dma.vmem_to_hbm [thread:$0]  %s267, 128, %s269, %s252
        $region40: #{tpu_custom_call.1} parent=27 // pred_fallthru
          _
      $region28: #{tpu_custom_call.1} parent=5 // pred_fallthru
        _
      %p272 = scmp.le.s32.totalorder 2, %s17
      // Predicated region
      $region41: #{tpu_custom_call.1} parent=5 // pred_check
        %p273 = pneg %p272
      $region42: #{tpu_custom_call.1} parent=5 // pred_check_branch
        %275 = sbr.rel (%p273) target = $region44
      $region43: #{tpu_custom_call.1} parent=5 // pred_region
        %s276 = ssub.s32 %s17, 2
        // Predicated region
        $region45: #{tpu_custom_call.1} parent=43 // pred_check
          %p277 = pneg %p114
        $region46: #{tpu_custom_call.1} parent=43 // pred_check_branch
          %279 = sbr.rel (%p277) target = $region48
        $region47: #{tpu_custom_call.1} parent=43 // pred_region
          %s280 = sand.u32 %s99, 1
          %s281 = scalar_lea.sflag [#allocation4], %s280
          %s282 = sand.u32 %s99, 1
          %s283 = smul.addr %s282, 8
          %s284 = scalar_lea.vmem [#allocation7], %s283
          %286 = dma.done %s281, 128
        $region48: #{tpu_custom_call.1} parent=43 // pred_fallthru
          _
      $region44: #{tpu_custom_call.1} parent=5 // pred_fallthru
        _
    $region6: #{tpu_custom_call.1} parent=1 // loop_footer
      %s21 = sadd.s32 1, %s17
    $region7: #{tpu_custom_call.1} parent=1 // loop_footer_branch
      %16 = sbr.rel target = $region3
    $region8: #{tpu_custom_call.1} parent=1 // loop_exit
      _
    %287 = vsyncpa [#allocation3], 1
    %s288 = scalar_lea.sflag [#allocation3], 1
    %289 = vsyncpa %s288, 1
    %290 = vsyncpa [#allocation6], 1
    %s291 = scalar_lea.sflag [#allocation6], 1
    %292 = vsyncpa %s291, 1
    %293 = vsyncpa [#allocation4], 1
    %s294 = scalar_lea.sflag [#allocation4], 1
    %295 = vsyncpa %s294, 1

</llo_original>
